<compile_context>
chip_gen: v6e
topology: v6e:2x2x1
jax: 0.10.0
libtpu: 0.0.40
codegen_flags: <defaults>
</compile_context>

<pallas_src>
import jax
import jax.numpy as jnp
from jax.experimental import pallas as pl
from jax.experimental.pallas import tpu as pltpu


def conv1x1_pad_sub_kernel(w_ref, x_ref, x2_ref, o_ref):
    # w_ref : (Cout, Cin) float32 in SMEM (scalar reads)
    # x_ref : (Cin, H, W)  unpadded input image (VMEM)
    # x2_ref: (CG, Hp, Wp) subtrahend block for this output-channel group (VMEM)
    # o_ref : (CG, Hp, Wp) output block (VMEM), Hp = H + 2, Wp = W + 2
    cin, H, W = x_ref.shape
    cg, Hp, Wp = o_ref.shape
    base = pl.program_id(1) * cg            # first output channel of this group

    x = x_ref[...]                          # (Cin, H, W)
    zcol = jnp.zeros((H, 1), dtype=o_ref.dtype)
    zrow = jnp.zeros((1, Wp), dtype=o_ref.dtype)

    for o in range(cg):                     # static unroll (cg <= 8)
        # 1x1 conv for this output channel: scalar-broadcast VPU MACs (no MXU).
        acc = w_ref[base + o, 0] * x[0]
        for c in range(1, cin):             # static unroll (Cin = 3)
            acc = acc + w_ref[base + o, c] * x[c]
        # Fold the conv's padding=1 in-kernel: surround the (H, W) interior
        # with zero border columns / rows -> (Hp, Wp).
        padded = jnp.concatenate([zcol, acc, zcol], axis=1)     # (H, Wp)
        padded = jnp.concatenate([zrow, padded, zrow], axis=0)  # (Hp, Wp)
        o_ref[o] = padded - x2_ref[o]


def model_forward(x_nchw, x2_nchw, weight_oihw):
    """x: (N, 3, H, W); x2: (N, 8, H+2, W+2); weight: (8, 3, 1, 1)."""
    N, Cin, H, W = x_nchw.shape
    Cout = weight_oihw.shape[0]
    Hp, Wp = H + 2, W + 2
    w2d = weight_oihw.reshape(Cout, Cin).astype(jnp.float32)

    # v7x has 2 TensorCores: when the batch alone cannot provide >= 2 parallel
    # grid steps, split the output channels into 2 groups so both cores get work.
    groups = 2 if (N < 2 and Cout % 2 == 0) else 1
    cg = Cout // groups
    grid = (N, groups)

    # Only raise the scoped-VMEM limit if the whole-image blocks actually need it
    # (relevant on v5e's 16 MiB default); small shapes keep the default.
    tile_bytes = 4 * (Cin * H * W + 2 * cg * Hp * Wp)     # one set of blocks
    params = dict(dimension_semantics=("parallel", "parallel"))
    if 2 * tile_bytes > 12 * 1024 * 1024:                 # double-buffered footprint
        params["vmem_limit_bytes"] = min(2 * tile_bytes + (4 << 20), 64 * 1024 * 1024)

    out = pl.pallas_call(
        conv1x1_pad_sub_kernel,
        out_shape=jax.ShapeDtypeStruct((N, Cout, Hp, Wp), jnp.float32),
        grid=grid,
        in_specs=[
            # Tiny weight table -> SMEM, read as scalars inside the kernel.
            pl.BlockSpec(memory_space=pltpu.MemorySpace.SMEM),
            # Whole unpadded image per grid step (last two dims = full extents).
            pl.BlockSpec((None, Cin, H, W), lambda n, g: (n, 0, 0, 0)),
            # Padded-size subtrahend for this channel group.
            pl.BlockSpec((None, cg, Hp, Wp), lambda n, g: (n, g, 0, 0)),
        ],
        out_specs=pl.BlockSpec((None, cg, Hp, Wp), lambda n, g: (n, g, 0, 0)),
        compiler_params=pltpu.CompilerParams(**params),
    )(w2d, x_nchw, x2_nchw)

    return out


def _reference(x, x2, weight):
    x_pad = jnp.pad(x, ((0, 0), (0, 0), (1, 1), (1, 1)))
    return jnp.einsum("nchw,oc->nohw", x_pad, weight[:, :, 0, 0],
                      precision=jax.lax.Precision.HIGHEST) - x2


if __name__ == "__main__":
    key = jax.random.PRNGKey(0)
    k1, k2, k3, k4, k5 = jax.random.split(key, 5)

    # Small shapes consistent with the module: N=2, Cin=3, Cout=8, H=W=16.
    N, Cin, Cout, H, W = 2, 3, 8, 16, 16
    Hp, Wp = H + 2, W + 2

    x = jax.random.normal(k1, (N, Cin, H, W), dtype=jnp.float32)
    x2 = jax.random.normal(k2, (N, Cout, Hp, Wp), dtype=jnp.float32)
    weight = jax.random.normal(k3, (Cout, Cin, 1, 1), dtype=jnp.float32) * 0.1

    out = jax.block_until_ready(model_forward(x, x2, weight))
    ref = _reference(x, x2, weight)
    assert out.shape == (N, Cout, Hp, Wp)
    assert jnp.allclose(out, ref, atol=1e-4, rtol=1e-4)

    # Also exercise the batch==1 path (channel-group split for v7x's 2 cores).
    x1 = jax.random.normal(k4, (1, Cin, H, W), dtype=jnp.float32)
    x21 = jax.random.normal(k5, (1, Cout, Hp, Wp), dtype=jnp.float32)
    out1 = jax.block_until_ready(model_forward(x1, x21, weight))
    ref1 = _reference(x1, x21, weight)
    assert jnp.allclose(out1, ref1, atol=1e-4, rtol=1e-4)

    print("KERNEL_OK")
</pallas_src>

<mosaic_0001>
module attributes {stable_mosaic.version = 11 : i64} {
  func.func @conv1x1_pad_sub_kernel(%arg0: i32, %arg1: i32, %arg2: memref<8x3xf32, #tpu.memory_space<smem>>, %arg3: memref<1x3x16x16xf32, #tpu.memory_space<vmem>>, %arg4: memref<1x8x18x18xf32, #tpu.memory_space<vmem>>, %arg5: memref<1x8x18x18xf32, #tpu.memory_space<vmem>>) attributes {dimension_semantics = [#tpu.dimension_semantics<parallel>, #tpu.dimension_semantics<parallel>], iteration_bounds = array<i64: 2, 1>, scalar_prefetch = 0 : i64, scratch_operands = 0 : i64, tpu.core_type = #tpu.core_type<tc>, window_params = [{transform_indices = @transform_0, window_bounds = array<i64: 8, 3>}, {transform_indices = @transform_1, window_bounds = array<i64: 1, 3, 16, 16>}, {transform_indices = @transform_2, window_bounds = array<i64: 1, 8, 18, 18>}, {transform_indices = @transform_3, window_bounds = array<i64: 1, 8, 18, 18>}]} {
    %c8_i32 = arith.constant 8 : i32
    %0 = arith.muli %arg1, %c8_i32 : i32
    %c0 = arith.constant 0 : index
    %c0_0 = arith.constant 0 : index
    %c0_1 = arith.constant 0 : index
    %c0_2 = arith.constant 0 : index
    %1 = vector.load %arg3[%c0, %c0_0, %c0_1, %c0_2] : memref<1x3x16x16xf32, #tpu.memory_space<vmem>>, vector<1x3x16x16xf32>
    %2 = vector.shape_cast %1 : vector<1x3x16x16xf32> to vector<3x16x16xf32>
    %cst = arith.constant 0.000000e+00 : f32
    %3 = vector.broadcast %cst : f32 to vector<16x1xf32>
    %cst_3 = arith.constant 0.000000e+00 : f32
    %4 = vector.broadcast %cst_3 : f32 to vector<1x18xf32>
    %c0_i32 = arith.constant 0 : i32
    %5 = arith.addi %0, %c0_i32 : i32
    %6 = arith.index_cast %5 : i32 to index
    %c0_4 = arith.constant 0 : index
    %7 = memref.load %arg2[%6, %c0_4] : memref<8x3xf32, #tpu.memory_space<smem>>
    %8 = vector.extract_strided_slice %2 {offsets = [0, 0, 0], sizes = [1, 16, 16], strides = [1, 1, 1]} : vector<3x16x16xf32> to vector<1x16x16xf32>
    %9 = vector.shape_cast %8 : vector<1x16x16xf32> to vector<16x16xf32>
    %10 = vector.broadcast %7 : f32 to vector<16x16xf32>
    %11 = arith.mulf %10, %9 : vector<16x16xf32>
    %c0_i32_5 = arith.constant 0 : i32
    %12 = arith.addi %0, %c0_i32_5 : i32
    %13 = arith.index_cast %12 : i32 to index
    %c1 = arith.constant 1 : index
    %14 = memref.load %arg2[%13, %c1] : memref<8x3xf32, #tpu.memory_space<smem>>
    %15 = vector.extract_strided_slice %2 {offsets = [1, 0, 0], sizes = [1, 16, 16], strides = [1, 1, 1]} : vector<3x16x16xf32> to vector<1x16x16xf32>
    %16 = vector.shape_cast %15 : vector<1x16x16xf32> to vector<16x16xf32>
    %17 = vector.broadcast %14 : f32 to vector<16x16xf32>
    %18 = arith.mulf %17, %16 : vector<16x16xf32>
    %19 = arith.addf %11, %18 : vector<16x16xf32>
    %c0_i32_6 = arith.constant 0 : i32
    %20 = arith.addi %0, %c0_i32_6 : i32
    %21 = arith.index_cast %20 : i32 to index
    %c2 = arith.constant 2 : index
    %22 = memref.load %arg2[%21, %c2] : memref<8x3xf32, #tpu.memory_space<smem>>
    %23 = vector.extract_strided_slice %2 {offsets = [2, 0, 0], sizes = [1, 16, 16], strides = [1, 1, 1]} : vector<3x16x16xf32> to vector<1x16x16xf32>
    %24 = vector.shape_cast %23 : vector<1x16x16xf32> to vector<16x16xf32>
    %25 = vector.broadcast %22 : f32 to vector<16x16xf32>
    %26 = arith.mulf %25, %24 : vector<16x16xf32>
    %27 = arith.addf %19, %26 : vector<16x16xf32>
    %28 = tpu.concatenate %3, %27, %3 in 1 : vector<16x1xf32>, vector<16x16xf32>, vector<16x1xf32> -> vector<16x18xf32>
    %29 = tpu.concatenate %4, %28, %4 in 0 : vector<1x18xf32>, vector<16x18xf32>, vector<1x18xf32> -> vector<18x18xf32>
    %c0_7 = arith.constant 0 : index
    %c0_8 = arith.constant 0 : index
    %c0_9 = arith.constant 0 : index
    %c0_10 = arith.constant 0 : index
    %30 = vector.load %arg4[%c0_7, %c0_8, %c0_9, %c0_10] : memref<1x8x18x18xf32, #tpu.memory_space<vmem>>, vector<1x1x18x18xf32>
    %31 = vector.shape_cast %30 : vector<1x1x18x18xf32> to vector<18x18xf32>
    %32 = arith.subf %29, %31 : vector<18x18xf32>
    %c0_11 = arith.constant 0 : index
    %c0_12 = arith.constant 0 : index
    %c0_13 = arith.constant 0 : index
    %c0_14 = arith.constant 0 : index
    %33 = vector.load %arg5[%c0_11, %c0_12, %c0_13, %c0_14] : memref<1x8x18x18xf32, #tpu.memory_space<vmem>>, vector<1x1x18x18xf32>
    %34 = vector.shape_cast %33 : vector<1x1x18x18xf32> to vector<18x18xf32>
    %35 = vector.shape_cast %32 : vector<18x18xf32> to vector<1x1x18x18xf32>
    tpu.vector_store %arg5[%c0_11, %c0_12, %c0_13, %c0_14], %35 {strides = array<i32>} : memref<1x8x18x18xf32, #tpu.memory_space<vmem>>, vector<1x1x18x18xf32>,
    %c1_i32 = arith.constant 1 : i32
    %36 = arith.addi %0, %c1_i32 : i32
    %37 = arith.index_cast %36 : i32 to index
    %c0_15 = arith.constant 0 : index
    %38 = memref.load %arg2[%37, %c0_15] : memref<8x3xf32, #tpu.memory_space<smem>>
    %39 = vector.extract_strided_slice %2 {offsets = [0, 0, 0], sizes = [1, 16, 16], strides = [1, 1, 1]} : vector<3x16x16xf32> to vector<1x16x16xf32>
    %40 = vector.shape_cast %39 : vector<1x16x16xf32> to vector<16x16xf32>
    %41 = vector.broadcast %38 : f32 to vector<16x16xf32>
    %42 = arith.mulf %41, %40 : vector<16x16xf32>
    %c1_i32_16 = arith.constant 1 : i32
    %43 = arith.addi %0, %c1_i32_16 : i32
    %44 = arith.index_cast %43 : i32 to index
    %c1_17 = arith.constant 1 : index
    %45 = memref.load %arg2[%44, %c1_17] : memref<8x3xf32, #tpu.memory_space<smem>>
    %46 = vector.extract_strided_slice %2 {offsets = [1, 0, 0], sizes = [1, 16, 16], strides = [1, 1, 1]} : vector<3x16x16xf32> to vector<1x16x16xf32>
    %47 = vector.shape_cast %46 : vector<1x16x16xf32> to vector<16x16xf32>
    %48 = vector.broadcast %45 : f32 to vector<16x16xf32>
    %49 = arith.mulf %48, %47 : vector<16x16xf32>
    %50 = arith.addf %42, %49 : vector<16x16xf32>
    %c1_i32_18 = arith.constant 1 : i32
    %51 = arith.addi %0, %c1_i32_18 : i32
    %52 = arith.index_cast %51 : i32 to index
    %c2_19 = arith.constant 2 : index
    %53 = memref.load %arg2[%52, %c2_19] : memref<8x3xf32, #tpu.memory_space<smem>>
    %54 = vector.extract_strided_slice %2 {offsets = [2, 0, 0], sizes = [1, 16, 16], strides = [1, 1, 1]} : vector<3x16x16xf32> to vector<1x16x16xf32>
    %55 = vector.shape_cast %54 : vector<1x16x16xf32> to vector<16x16xf32>
    %56 = vector.broadcast %53 : f32 to vector<16x16xf32>
    %57 = arith.mulf %56, %55 : vector<16x16xf32>
    %58 = arith.addf %50, %57 : vector<16x16xf32>
    %59 = tpu.concatenate %3, %58, %3 in 1 : vector<16x1xf32>, vector<16x16xf32>, vector<16x1xf32> -> vector<16x18xf32>
    %60 = tpu.concatenate %4, %59, %4 in 0 : vector<1x18xf32>, vector<16x18xf32>, vector<1x18xf32> -> vector<18x18xf32>
    %c0_20 = arith.constant 0 : index
    %c1_21 = arith.constant 1 : index
    %c0_22 = arith.constant 0 : index
    %c0_23 = arith.constant 0 : index
    %61 = vector.load %arg4[%c0_20, %c1_21, %c0_22, %c0_23] : memref<1x8x18x18xf32, #tpu.memory_space<vmem>>, vector<1x1x18x18xf32>
    %62 = vector.shape_cast %61 : vector<1x1x18x18xf32> to vector<18x18xf32>
    %63 = arith.subf %60, %62 : vector<18x18xf32>
    %c0_24 = arith.constant 0 : index
    %c1_25 = arith.constant 1 : index
    %c0_26 = arith.constant 0 : index
    %c0_27 = arith.constant 0 : index
    %64 = vector.load %arg5[%c0_24, %c1_25, %c0_26, %c0_27] : memref<1x8x18x18xf32, #tpu.memory_space<vmem>>, vector<1x1x18x18xf32>
    %65 = vector.shape_cast %64 : vector<1x1x18x18xf32> to vector<18x18xf32>
    %66 = vector.shape_cast %63 : vector<18x18xf32> to vector<1x1x18x18xf32>
    tpu.vector_store %arg5[%c0_24, %c1_25, %c0_26, %c0_27], %66 {strides = array<i32>} : memref<1x8x18x18xf32, #tpu.memory_space<vmem>>, vector<1x1x18x18xf32>,
    %c2_i32 = arith.constant 2 : i32
    %67 = arith.addi %0, %c2_i32 : i32
    %68 = arith.index_cast %67 : i32 to index
    %c0_28 = arith.constant 0 : index
    %69 = memref.load %arg2[%68, %c0_28] : memref<8x3xf32, #tpu.memory_space<smem>>
    %70 = vector.extract_strided_slice %2 {offsets = [0, 0, 0], sizes = [1, 16, 16], strides = [1, 1, 1]} : vector<3x16x16xf32> to vector<1x16x16xf32>
    %71 = vector.shape_cast %70 : vector<1x16x16xf32> to vector<16x16xf32>
    %72 = vector.broadcast %69 : f32 to vector<16x16xf32>
    %73 = arith.mulf %72, %71 : vector<16x16xf32>
    %c2_i32_29 = arith.constant 2 : i32
    %74 = arith.addi %0, %c2_i32_29 : i32
    %75 = arith.index_cast %74 : i32 to index
    %c1_30 = arith.constant 1 : index
    %76 = memref.load %arg2[%75, %c1_30] : memref<8x3xf32, #tpu.memory_space<smem>>
    %77 = vector.extract_strided_slice %2 {offsets = [1, 0, 0], sizes = [1, 16, 16], strides = [1, 1, 1]} : vector<3x16x16xf32> to vector<1x16x16xf32>
    %78 = vector.shape_cast %77 : vector<1x16x16xf32> to vector<16x16xf32>
    %79 = vector.broadcast %76 : f32 to vector<16x16xf32>
    %80 = arith.mulf %79, %78 : vector<16x16xf32>
    %81 = arith.addf %73, %80 : vector<16x16xf32>
    %c2_i32_31 = arith.constant 2 : i32
    %82 = arith.addi %0, %c2_i32_31 : i32
    %83 = arith.index_cast %82 : i32 to index
    %c2_32 = arith.constant 2 : index
    %84 = memref.load %arg2[%83, %c2_32] : memref<8x3xf32, #tpu.memory_space<smem>>
    %85 = vector.extract_strided_slice %2 {offsets = [2, 0, 0], sizes = [1, 16, 16], strides = [1, 1, 1]} : vector<3x16x16xf32> to vector<1x16x16xf32>
    %86 = vector.shape_cast %85 : vector<1x16x16xf32> to vector<16x16xf32>
    %87 = vector.broadcast %84 : f32 to vector<16x16xf32>
    %88 = arith.mulf %87, %86 : vector<16x16xf32>
    %89 = arith.addf %81, %88 : vector<16x16xf32>
    %90 = tpu.concatenate %3, %89, %3 in 1 : vector<16x1xf32>, vector<16x16xf32>, vector<16x1xf32> -> vector<16x18xf32>
    %91 = tpu.concatenate %4, %90, %4 in 0 : vector<1x18xf32>, vector<16x18xf32>, vector<1x18xf32> -> vector<18x18xf32>
    %c0_33 = arith.constant 0 : index
    %c2_34 = arith.constant 2 : index
    %c0_35 = arith.constant 0 : index
    %c0_36 = arith.constant 0 : index
    %92 = vector.load %arg4[%c0_33, %c2_34, %c0_35, %c0_36] : memref<1x8x18x18xf32, #tpu.memory_space<vmem>>, vector<1x1x18x18xf32>
    %93 = vector.shape_cast %92 : vector<1x1x18x18xf32> to vector<18x18xf32>
    %94 = arith.subf %91, %93 : vector<18x18xf32>
    %c0_37 = arith.constant 0 : index
    %c2_38 = arith.constant 2 : index
    %c0_39 = arith.constant 0 : index
    %c0_40 = arith.constant 0 : index
    %95 = vector.load %arg5[%c0_37, %c2_38, %c0_39, %c0_40] : memref<1x8x18x18xf32, #tpu.memory_space<vmem>>, vector<1x1x18x18xf32>
    %96 = vector.shape_cast %95 : vector<1x1x18x18xf32> to vector<18x18xf32>
    %97 = vector.shape_cast %94 : vector<18x18xf32> to vector<1x1x18x18xf32>
    tpu.vector_store %arg5[%c0_37, %c2_38, %c0_39, %c0_40], %97 {strides = array<i32>} : memref<1x8x18x18xf32, #tpu.memory_space<vmem>>, vector<1x1x18x18xf32>,
    %c3_i32 = arith.constant 3 : i32
    %98 = arith.addi %0, %c3_i32 : i32
    %99 = arith.index_cast %98 : i32 to index
    %c0_41 = arith.constant 0 : index
    %100 = memref.load %arg2[%99, %c0_41] : memref<8x3xf32, #tpu.memory_space<smem>>
    %101 = vector.extract_strided_slice %2 {offsets = [0, 0, 0], sizes = [1, 16, 16], strides = [1, 1, 1]} : vector<3x16x16xf32> to vector<1x16x16xf32>
    %102 = vector.shape_cast %101 : vector<1x16x16xf32> to vector<16x16xf32>
    %103 = vector.broadcast %100 : f32 to vector<16x16xf32>
    %104 = arith.mulf %103, %102 : vector<16x16xf32>
    %c3_i32_42 = arith.constant 3 : i32
    %105 = arith.addi %0, %c3_i32_42 : i32
    %106 = arith.index_cast %105 : i32 to index
    %c1_43 = arith.constant 1 : index
    %107 = memref.load %arg2[%106, %c1_43] : memref<8x3xf32, #tpu.memory_space<smem>>
    %108 = vector.extract_strided_slice %2 {offsets = [1, 0, 0], sizes = [1, 16, 16], strides = [1, 1, 1]} : vector<3x16x16xf32> to vector<1x16x16xf32>
    %109 = vector.shape_cast %108 : vector<1x16x16xf32> to vector<16x16xf32>
    %110 = vector.broadcast %107 : f32 to vector<16x16xf32>
    %111 = arith.mulf %110, %109 : vector<16x16xf32>
    %112 = arith.addf %104, %111 : vector<16x16xf32>
    %c3_i32_44 = arith.constant 3 : i32
    %113 = arith.addi %0, %c3_i32_44 : i32
    %114 = arith.index_cast %113 : i32 to index
    %c2_45 = arith.constant 2 : index
    %115 = memref.load %arg2[%114, %c2_45] : memref<8x3xf32, #tpu.memory_space<smem>>
    %116 = vector.extract_strided_slice %2 {offsets = [2, 0, 0], sizes = [1, 16, 16], strides = [1, 1, 1]} : vector<3x16x16xf32> to vector<1x16x16xf32>
    %117 = vector.shape_cast %116 : vector<1x16x16xf32> to vector<16x16xf32>
    %118 = vector.broadcast %115 : f32 to vector<16x16xf32>
    %119 = arith.mulf %118, %117 : vector<16x16xf32>
    %120 = arith.addf %112, %119 : vector<16x16xf32>
    %121 = tpu.concatenate %3, %120, %3 in 1 : vector<16x1xf32>, vector<16x16xf32>, vector<16x1xf32> -> vector<16x18xf32>
    %122 = tpu.concatenate %4, %121, %4 in 0 : vector<1x18xf32>, vector<16x18xf32>, vector<1x18xf32> -> vector<18x18xf32>
    %c0_46 = arith.constant 0 : index
    %c3 = arith.constant 3 : index
    %c0_47 = arith.constant 0 : index
    %c0_48 = arith.constant 0 : index
    %123 = vector.load %arg4[%c0_46, %c3, %c0_47, %c0_48] : memref<1x8x18x18xf32, #tpu.memory_space<vmem>>, vector<1x1x18x18xf32>
    %124 = vector.shape_cast %123 : vector<1x1x18x18xf32> to vector<18x18xf32>
    %125 = arith.subf %122, %124 : vector<18x18xf32>
    %c0_49 = arith.constant 0 : index
    %c3_50 = arith.constant 3 : index
    %c0_51 = arith.constant 0 : index
    %c0_52 = arith.constant 0 : index
    %126 = vector.load %arg5[%c0_49, %c3_50, %c0_51, %c0_52] : memref<1x8x18x18xf32, #tpu.memory_space<vmem>>, vector<1x1x18x18xf32>
    %127 = vector.shape_cast %126 : vector<1x1x18x18xf32> to vector<18x18xf32>
    %128 = vector.shape_cast %125 : vector<18x18xf32> to vector<1x1x18x18xf32>
    tpu.vector_store %arg5[%c0_49, %c3_50, %c0_51, %c0_52], %128 {strides = array<i32>} : memref<1x8x18x18xf32, #tpu.memory_space<vmem>>, vector<1x1x18x18xf32>,
    %c4_i32 = arith.constant 4 : i32
    %129 = arith.addi %0, %c4_i32 : i32
    %130 = arith.index_cast %129 : i32 to index
    %c0_53 = arith.constant 0 : index
    %131 = memref.load %arg2[%130, %c0_53] : memref<8x3xf32, #tpu.memory_space<smem>>
    %132 = vector.extract_strided_slice %2 {offsets = [0, 0, 0], sizes = [1, 16, 16], strides = [1, 1, 1]} : vector<3x16x16xf32> to vector<1x16x16xf32>
    %133 = vector.shape_cast %132 : vector<1x16x16xf32> to vector<16x16xf32>
    %134 = vector.broadcast %131 : f32 to vector<16x16xf32>
    %135 = arith.mulf %134, %133 : vector<16x16xf32>
    %c4_i32_54 = arith.constant 4 : i32
    %136 = arith.addi %0, %c4_i32_54 : i32
    %137 = arith.index_cast %136 : i32 to index
    %c1_55 = arith.constant 1 : index
    %138 = memref.load %arg2[%137, %c1_55] : memref<8x3xf32, #tpu.memory_space<smem>>
    %139 = vector.extract_strided_slice %2 {offsets = [1, 0, 0], sizes = [1, 16, 16], strides = [1, 1, 1]} : vector<3x16x16xf32> to vector<1x16x16xf32>
    %140 = vector.shape_cast %139 : vector<1x16x16xf32> to vector<16x16xf32>
    %141 = vector.broadcast %138 : f32 to vector<16x16xf32>
    %142 = arith.mulf %141, %140 : vector<16x16xf32>
    %143 = arith.addf %135, %142 : vector<16x16xf32>
    %c4_i32_56 = arith.constant 4 : i32
    %144 = arith.addi %0, %c4_i32_56 : i32
    %145 = arith.index_cast %144 : i32 to index
    %c2_57 = arith.constant 2 : index
    %146 = memref.load %arg2[%145, %c2_57] : memref<8x3xf32, #tpu.memory_space<smem>>
    %147 = vector.extract_strided_slice %2 {offsets = [2, 0, 0], sizes = [1, 16, 16], strides = [1, 1, 1]} : vector<3x16x16xf32> to vector<1x16x16xf32>
    %148 = vector.shape_cast %147 : vector<1x16x16xf32> to vector<16x16xf32>
    %149 = vector.broadcast %146 : f32 to vector<16x16xf32>
    %150 = arith.mulf %149, %148 : vector<16x16xf32>
    %151 = arith.addf %143, %150 : vector<16x16xf32>
    %152 = tpu.concatenate %3, %151, %3 in 1 : vector<16x1xf32>, vector<16x16xf32>, vector<16x1xf32> -> vector<16x18xf32>
    %153 = tpu.concatenate %4, %152, %4 in 0 : vector<1x18xf32>, vector<16x18xf32>, vector<1x18xf32> -> vector<18x18xf32>
    %c0_58 = arith.constant 0 : index
    %c4 = arith.constant 4 : index
    %c0_59 = arith.constant 0 : index
    %c0_60 = arith.constant 0 : index
    %154 = vector.load %arg4[%c0_58, %c4, %c0_59, %c0_60] : memref<1x8x18x18xf32, #tpu.memory_space<vmem>>, vector<1x1x18x18xf32>
    %155 = vector.shape_cast %154 : vector<1x1x18x18xf32> to vector<18x18xf32>
    %156 = arith.subf %153, %155 : vector<18x18xf32>
    %c0_61 = arith.constant 0 : index
    %c4_62 = arith.constant 4 : index
    %c0_63 = arith.constant 0 : index
    %c0_64 = arith.constant 0 : index
    %157 = vector.load %arg5[%c0_61, %c4_62, %c0_63, %c0_64] : memref<1x8x18x18xf32, #tpu.memory_space<vmem>>, vector<1x1x18x18xf32>
    %158 = vector.shape_cast %157 : vector<1x1x18x18xf32> to vector<18x18xf32>
    %159 = vector.shape_cast %156 : vector<18x18xf32> to vector<1x1x18x18xf32>
    tpu.vector_store %arg5[%c0_61, %c4_62, %c0_63, %c0_64], %159 {strides = array<i32>} : memref<1x8x18x18xf32, #tpu.memory_space<vmem>>, vector<1x1x18x18xf32>,
    %c5_i32 = arith.constant 5 : i32
    %160 = arith.addi %0, %c5_i32 : i32
    %161 = arith.index_cast %160 : i32 to index
    %c0_65 = arith.constant 0 : index
    %162 = memref.load %arg2[%161, %c0_65] : memref<8x3xf32, #tpu.memory_space<smem>>
    %163 = vector.extract_strided_slice %2 {offsets = [0, 0, 0], sizes = [1, 16, 16], strides = [1, 1, 1]} : vector<3x16x16xf32> to vector<1x16x16xf32>
    %164 = vector.shape_cast %163 : vector<1x16x16xf32> to vector<16x16xf32>
    %165 = vector.broadcast %162 : f32 to vector<16x16xf32>
    %166 = arith.mulf %165, %164 : vector<16x16xf32>
    %c5_i32_66 = arith.constant 5 : i32
    %167 = arith.addi %0, %c5_i32_66 : i32
    %168 = arith.index_cast %167 : i32 to index
    %c1_67 = arith.constant 1 : index
    %169 = memref.load %arg2[%168, %c1_67] : memref<8x3xf32, #tpu.memory_space<smem>>
    %170 = vector.extract_strided_slice %2 {offsets = [1, 0, 0], sizes = [1, 16, 16], strides = [1, 1, 1]} : vector<3x16x16xf32> to vector<1x16x16xf32>
    %171 = vector.shape_cast %170 : vector<1x16x16xf32> to vector<16x16xf32>
    %172 = vector.broadcast %169 : f32 to vector<16x16xf32>
    %173 = arith.mulf %172, %171 : vector<16x16xf32>
    %174 = arith.addf %166, %173 : vector<16x16xf32>
    %c5_i32_68 = arith.constant 5 : i32
    %175 = arith.addi %0, %c5_i32_68 : i32
    %176 = arith.index_cast %175 : i32 to index
    %c2_69 = arith.constant 2 : index
    %177 = memref.load %arg2[%176, %c2_69] : memref<8x3xf32, #tpu.memory_space<smem>>
    %178 = vector.extract_strided_slice %2 {offsets = [2, 0, 0], sizes = [1, 16, 16], strides = [1, 1, 1]} : vector<3x16x16xf32> to vector<1x16x16xf32>
    %179 = vector.shape_cast %178 : vector<1x16x16xf32> to vector<16x16xf32>
    %180 = vector.broadcast %177 : f32 to vector<16x16xf32>
    %181 = arith.mulf %180, %179 : vector<16x16xf32>
    %182 = arith.addf %174, %181 : vector<16x16xf32>
    %183 = tpu.concatenate %3, %182, %3 in 1 : vector<16x1xf32>, vector<16x16xf32>, vector<16x1xf32> -> vector<16x18xf32>
    %184 = tpu.concatenate %4, %183, %4 in 0 : vector<1x18xf32>, vector<16x18xf32>, vector<1x18xf32> -> vector<18x18xf32>
    %c0_70 = arith.constant 0 : index
    %c5 = arith.constant 5 : index
    %c0_71 = arith.constant 0 : index
    %c0_72 = arith.constant 0 : index
    %185 = vector.load %arg4[%c0_70, %c5, %c0_71, %c0_72] : memref<1x8x18x18xf32, #tpu.memory_space<vmem>>, vector<1x1x18x18xf32>
    %186 = vector.shape_cast %185 : vector<1x1x18x18xf32> to vector<18x18xf32>
    %187 = arith.subf %184, %186 : vector<18x18xf32>
    %c0_73 = arith.constant 0 : index
    %c5_74 = arith.constant 5 : index
    %c0_75 = arith.constant 0 : index
    %c0_76 = arith.constant 0 : index
    %188 = vector.load %arg5[%c0_73, %c5_74, %c0_75, %c0_76] : memref<1x8x18x18xf32, #tpu.memory_space<vmem>>, vector<1x1x18x18xf32>
    %189 = vector.shape_cast %188 : vector<1x1x18x18xf32> to vector<18x18xf32>
    %190 = vector.shape_cast %187 : vector<18x18xf32> to vector<1x1x18x18xf32>
    tpu.vector_store %arg5[%c0_73, %c5_74, %c0_75, %c0_76], %190 {strides = array<i32>} : memref<1x8x18x18xf32, #tpu.memory_space<vmem>>, vector<1x1x18x18xf32>,
    %c6_i32 = arith.constant 6 : i32
    %191 = arith.addi %0, %c6_i32 : i32
    %192 = arith.index_cast %191 : i32 to index
    %c0_77 = arith.constant 0 : index
    %193 = memref.load %arg2[%192, %c0_77] : memref<8x3xf32, #tpu.memory_space<smem>>
    %194 = vector.extract_strided_slice %2 {offsets = [0, 0, 0], sizes = [1, 16, 16], strides = [1, 1, 1]} : vector<3x16x16xf32> to vector<1x16x16xf32>
    %195 = vector.shape_cast %194 : vector<1x16x16xf32> to vector<16x16xf32>
    %196 = vector.broadcast %193 : f32 to vector<16x16xf32>
    %197 = arith.mulf %196, %195 : vector<16x16xf32>
    %c6_i32_78 = arith.constant 6 : i32
    %198 = arith.addi %0, %c6_i32_78 : i32
    %199 = arith.index_cast %198 : i32 to index
    %c1_79 = arith.constant 1 : index
    %200 = memref.load %arg2[%199, %c1_79] : memref<8x3xf32, #tpu.memory_space<smem>>
    %201 = vector.extract_strided_slice %2 {offsets = [1, 0, 0], sizes = [1, 16, 16], strides = [1, 1, 1]} : vector<3x16x16xf32> to vector<1x16x16xf32>
    %202 = vector.shape_cast %201 : vector<1x16x16xf32> to vector<16x16xf32>
    %203 = vector.broadcast %200 : f32 to vector<16x16xf32>
    %204 = arith.mulf %203, %202 : vector<16x16xf32>
    %205 = arith.addf %197, %204 : vector<16x16xf32>
    %c6_i32_80 = arith.constant 6 : i32
    %206 = arith.addi %0, %c6_i32_80 : i32
    %207 = arith.index_cast %206 : i32 to index
    %c2_81 = arith.constant 2 : index
    %208 = memref.load %arg2[%207, %c2_81] : memref<8x3xf32, #tpu.memory_space<smem>>
    %209 = vector.extract_strided_slice %2 {offsets = [2, 0, 0], sizes = [1, 16, 16], strides = [1, 1, 1]} : vector<3x16x16xf32> to vector<1x16x16xf32>
    %210 = vector.shape_cast %209 : vector<1x16x16xf32> to vector<16x16xf32>
    %211 = vector.broadcast %208 : f32 to vector<16x16xf32>
    %212 = arith.mulf %211, %210 : vector<16x16xf32>
    %213 = arith.addf %205, %212 : vector<16x16xf32>
    %214 = tpu.concatenate %3, %213, %3 in 1 : vector<16x1xf32>, vector<16x16xf32>, vector<16x1xf32> -> vector<16x18xf32>
    %215 = tpu.concatenate %4, %214, %4 in 0 : vector<1x18xf32>, vector<16x18xf32>, vector<1x18xf32> -> vector<18x18xf32>
    %c0_82 = arith.constant 0 : index
    %c6 = arith.constant 6 : index
    %c0_83 = arith.constant 0 : index
    %c0_84 = arith.constant 0 : index
    %216 = vector.load %arg4[%c0_82, %c6, %c0_83, %c0_84] : memref<1x8x18x18xf32, #tpu.memory_space<vmem>>, vector<1x1x18x18xf32>
    %217 = vector.shape_cast %216 : vector<1x1x18x18xf32> to vector<18x18xf32>
    %218 = arith.subf %215, %217 : vector<18x18xf32>
    %c0_85 = arith.constant 0 : index
    %c6_86 = arith.constant 6 : index
    %c0_87 = arith.constant 0 : index
    %c0_88 = arith.constant 0 : index
    %219 = vector.load %arg5[%c0_85, %c6_86, %c0_87, %c0_88] : memref<1x8x18x18xf32, #tpu.memory_space<vmem>>, vector<1x1x18x18xf32>
    %220 = vector.shape_cast %219 : vector<1x1x18x18xf32> to vector<18x18xf32>
    %221 = vector.shape_cast %218 : vector<18x18xf32> to vector<1x1x18x18xf32>
    tpu.vector_store %arg5[%c0_85, %c6_86, %c0_87, %c0_88], %221 {strides = array<i32>} : memref<1x8x18x18xf32, #tpu.memory_space<vmem>>, vector<1x1x18x18xf32>,
    %c7_i32 = arith.constant 7 : i32
    %222 = arith.addi %0, %c7_i32 : i32
    %223 = arith.index_cast %222 : i32 to index
    %c0_89 = arith.constant 0 : index
    %224 = memref.load %arg2[%223, %c0_89] : memref<8x3xf32, #tpu.memory_space<smem>>
    %225 = vector.extract_strided_slice %2 {offsets = [0, 0, 0], sizes = [1, 16, 16], strides = [1, 1, 1]} : vector<3x16x16xf32> to vector<1x16x16xf32>
    %226 = vector.shape_cast %225 : vector<1x16x16xf32> to vector<16x16xf32>
    %227 = vector.broadcast %224 : f32 to vector<16x16xf32>
    %228 = arith.mulf %227, %226 : vector<16x16xf32>
    %c7_i32_90 = arith.constant 7 : i32
    %229 = arith.addi %0, %c7_i32_90 : i32
    %230 = arith.index_cast %229 : i32 to index
    %c1_91 = arith.constant 1 : index
    %231 = memref.load %arg2[%230, %c1_91] : memref<8x3xf32, #tpu.memory_space<smem>>
    %232 = vector.extract_strided_slice %2 {offsets = [1, 0, 0], sizes = [1, 16, 16], strides = [1, 1, 1]} : vector<3x16x16xf32> to vector<1x16x16xf32>
    %233 = vector.shape_cast %232 : vector<1x16x16xf32> to vector<16x16xf32>
    %234 = vector.broadcast %231 : f32 to vector<16x16xf32>
    %235 = arith.mulf %234, %233 : vector<16x16xf32>
    %236 = arith.addf %228, %235 : vector<16x16xf32>
    %c7_i32_92 = arith.constant 7 : i32
    %237 = arith.addi %0, %c7_i32_92 : i32
    %238 = arith.index_cast %237 : i32 to index
    %c2_93 = arith.constant 2 : index
    %239 = memref.load %arg2[%238, %c2_93] : memref<8x3xf32, #tpu.memory_space<smem>>
    %240 = vector.extract_strided_slice %2 {offsets = [2, 0, 0], sizes = [1, 16, 16], strides = [1, 1, 1]} : vector<3x16x16xf32> to vector<1x16x16xf32>
    %241 = vector.shape_cast %240 : vector<1x16x16xf32> to vector<16x16xf32>
    %242 = vector.broadcast %239 : f32 to vector<16x16xf32>
    %243 = arith.mulf %242, %241 : vector<16x16xf32>
    %244 = arith.addf %236, %243 : vector<16x16xf32>
    %245 = tpu.concatenate %3, %244, %3 in 1 : vector<16x1xf32>, vector<16x16xf32>, vector<16x1xf32> -> vector<16x18xf32>
    %246 = tpu.concatenate %4, %245, %4 in 0 : vector<1x18xf32>, vector<16x18xf32>, vector<1x18xf32> -> vector<18x18xf32>
    %c0_94 = arith.constant 0 : index
    %c7 = arith.constant 7 : index
    %c0_95 = arith.constant 0 : index
    %c0_96 = arith.constant 0 : index
    %247 = vector.load %arg4[%c0_94, %c7, %c0_95, %c0_96] : memref<1x8x18x18xf32, #tpu.memory_space<vmem>>, vector<1x1x18x18xf32>
    %248 = vector.shape_cast %247 : vector<1x1x18x18xf32> to vector<18x18xf32>
    %249 = arith.subf %246, %248 : vector<18x18xf32>
    %c0_97 = arith.constant 0 : index
    %c7_98 = arith.constant 7 : index
    %c0_99 = arith.constant 0 : index
    %c0_100 = arith.constant 0 : index
    %250 = vector.load %arg5[%c0_97, %c7_98, %c0_99, %c0_100] : memref<1x8x18x18xf32, #tpu.memory_space<vmem>>, vector<1x1x18x18xf32>
    %251 = vector.shape_cast %250 : vector<1x1x18x18xf32> to vector<18x18xf32>
    %252 = vector.shape_cast %249 : vector<18x18xf32> to vector<1x1x18x18xf32>
    tpu.vector_store %arg5[%c0_97, %c7_98, %c0_99, %c0_100], %252 {strides = array<i32>} : memref<1x8x18x18xf32, #tpu.memory_space<vmem>>, vector<1x1x18x18xf32>,
    return
  }
  func.func @transform_0(%arg0: i32, %arg1: i32) -> (i32, i32) {
    %c0_i32 = arith.constant 0 : i32
    %c0_i32_0 = arith.constant 0 : i32
    %c0_i32_1 = arith.constant 0 : i32
    return %c0_i32, %c0_i32_0 : i32, i32
  }
  func.func @transform_1(%arg0: i32, %arg1: i32) -> (i32, i32, i32, i32) {
    %c0_i32 = arith.constant 0 : i32
    %c0_i32_0 = arith.constant 0 : i32
    %c0_i32_1 = arith.constant 0 : i32
    %c0_i32_2 = arith.constant 0 : i32
    return %arg0, %c0_i32, %c0_i32_0, %c0_i32_1 : i32, i32, i32, i32
  }
  func.func @transform_2(%arg0: i32, %arg1: i32) -> (i32, i32, i32, i32) {
    %c0_i32 = arith.constant 0 : i32
    %c0_i32_0 = arith.constant 0 : i32
    %c0_i32_1 = arith.constant 0 : i32
    return %arg0, %arg1, %c0_i32, %c0_i32_0 : i32, i32, i32, i32
  }
  func.func @transform_3(%arg0: i32, %arg1: i32) -> (i32, i32, i32, i32) {
    %c0_i32 = arith.constant 0 : i32
    %c0_i32_0 = arith.constant 0 : i32
    %c0_i32_1 = arith.constant 0 : i32
    return %arg0, %arg1, %c0_i32, %c0_i32_0 : i32, i32, i32, i32
  }
}

</mosaic_0001>

<llo_original>
// kernel: tpu_custom_call.1
$region0: #{tpu_custom_call.1}
  #allocation0 [shape = 'u32[]', space=smem, size = 0x4, offset = 0x4, fixed_abs, tag = 'smem constant byte address 0x4 - core index']
  #allocation1 [shape = 'u32[144,128]{1,0:T(1,128)}', space=vmem, size = 0x12000, scoped, tag = 'internal scratch']
  %s0 = inlined_call_operand.vmem [shape: f32[8,3], index: 0, kind: input, shape index: {}]
  %s1 = inlined_call_operand.vmem [shape: f32[2,3,16,16], index: 1, kind: input, shape index: {}]
  %s2 = inlined_call_operand.vmem [shape: f32[2,8,18,18], index: 2, kind: input, shape index: {}]
  %s3 = inlined_call_operand.vmem [shape: f32[2,8,18,18], index: 3, kind: output, shape index: {}]
  %s4 = sld [smem:[#allocation0]]
  $region49: #{tpu_custom_call.1} parent=0
    _
  %s6 = ssub.s32 1, %s4
  %s7 = scalar_select 0, %s6, %s4
  $region1: #{tpu_custom_call.1} parent=0
    #allocation2 [shape = 'u8[4096]{0}', space=smem, size = 0x1000, scoped, tag = 'input window, operand 0, single buffered']
    #allocation3 [shape = 's32[2]{0}', space=sflag, size = 0x8, scoped, tag = 'scoped memory for tpu_custom_call.1']
    %8 = vsyncpa [#allocation3], 0
    loop: start=0, step=1, limit=4
    $region2: #{tpu_custom_call.1} parent=1 // loop_pre_header
      _
    $region3: #{tpu_custom_call.1} parent=1 // loop_header
      %s10 = sphi 0, %s14
      %p11 = scmp.ge.s32.totalorder %s10, 4
      %s17 = sphi 0, %s29
      %s18 = sphi 0, %s25
      %s19 = sphi 0, %s17
      %s20 = sphi 0, %s18
      %s21 = sphi 0, %s19
      %s22 = sphi 0, %s20
      %s30 = sphi 0, %s30
      %s32 = sphi 0, %s30
      %s33 = sphi 0, %s32
      %s47 = sphi 0, %s33
      %s53 = sphi 0, %s55
      %s56 = sphi 0, %s53
      %s57 = sphi 0, %s56
      %s73 = sphi 0, %s57
      %s81 = sphi 0, %s83
      %s84 = sphi 0, %s81
      %s85 = sphi 0, %s84
      %s101 = sphi 0, %s85
      %s109 = sphi 0, %s111
      %s112 = sphi 0, %s109
      %s113 = sphi 0, %s112
      %s129 = sphi 0, %s113
    $region4: #{tpu_custom_call.1} parent=1 // loop_header_branch
      %13 = sbr.rel (%p11) target = $region8
    $region5: #{tpu_custom_call.1} parent=1 // loop_body
      %s15 = ssub.s32 %s10, 1
      %s16 = ssub.s32 %s10, 2
      %s23 = sadd.s32 1, %s18
      %p24 = scmp.ge.s32.totalorder %s23, 1
      %s25 = scalar_select %p24, 0, %s23
      %s26 = sadd.s32 1, %s17
      %s27 = scalar_select %p24, %s26, %s17
      %p28 = scmp.ge.s32.totalorder %s27, 2
      %s29 = scalar_select %p28, 0, %s27
      %s31 = sadd.s32 %s30, 1
      %p34 = scmp.eq.s32.totalorder %s10, 1
      %p35 = scmp.ne.s32.totalorder %s30, %s32
      %p36 = scmp.eq.s32.totalorder %s10, 0
      %p37 = por %p35, %p36
      %p38 = scmp.ne.s32.totalorder %s30, %s32
      %p39 = scmp.eq.s32.totalorder %s15, 1
      %p40 = por %p38, %p39
      %p41 = scmp.ne.s32.totalorder %s32, %s33
      %p42 = scmp.eq.s32.totalorder %s15, 0
      %p43 = por %p41, %p42
      %p44 = scmp.ne.s32.totalorder %s32, %s33
      %p45 = scmp.eq.s32.totalorder %s16, 1
      %p46 = por %p44, %p45
      %p48 = scmp.ne.s32.totalorder %s33, %s47
      %p49 = scmp.eq.s32.totalorder %s16, 0
      %p50 = por %p48, %p49
      %s51 = ssub.s32 %s17, %s29
      %p52 = scmp.eq.s32.totalorder %s51, 0
      %s54 = sadd.s32 %s53, 1
      %s55 = scalar_select %p52, %s53, %s54
      %p58 = pneg %p52
      %p59 = scmp.eq.s32.totalorder %s10, 1
      %p60 = por %p58, %p59
      %p61 = scmp.ne.s32.totalorder %s53, %s56
      %p62 = scmp.eq.s32.totalorder %s10, 0
      %p63 = por %p61, %p62
      %p64 = scmp.ne.s32.totalorder %s53, %s56
      %p65 = scmp.eq.s32.totalorder %s15, 1
      %p66 = por %p64, %p65
      %p67 = scmp.ne.s32.totalorder %s56, %s57
      %p68 = scmp.eq.s32.totalorder %s15, 0
      %p69 = por %p67, %p68
      %p70 = scmp.ne.s32.totalorder %s56, %s57
      %p71 = scmp.eq.s32.totalorder %s16, 1
      %p72 = por %p70, %p71
      %p74 = scmp.ne.s32.totalorder %s57, %s73
      %p75 = scmp.eq.s32.totalorder %s16, 0
      %p76 = por %p74, %p75
      %s77 = ssub.s32 %s17, %s29
      %s78 = ssub.s32 %s18, %s25
      %s79 = sor.u32 %s77, %s78
      %p80 = scmp.eq.s32.totalorder %s79, 0
      %s82 = sadd.s32 %s81, 1
      %s83 = scalar_select %p80, %s81, %s82
      %p86 = pneg %p80
      %p87 = scmp.eq.s32.totalorder %s10, 1
      %p88 = por %p86, %p87
      %p89 = scmp.ne.s32.totalorder %s81, %s84
      %p90 = scmp.eq.s32.totalorder %s10, 0
      %p91 = por %p89, %p90
      %p92 = scmp.ne.s32.totalorder %s81, %s84
      %p93 = scmp.eq.s32.totalorder %s15, 1
      %p94 = por %p92, %p93
      %p95 = scmp.ne.s32.totalorder %s84, %s85
      %p96 = scmp.eq.s32.totalorder %s15, 0
      %p97 = por %p95, %p96
      %p98 = scmp.ne.s32.totalorder %s84, %s85
      %p99 = scmp.eq.s32.totalorder %s16, 1
      %p100 = por %p98, %p99
      %p102 = scmp.ne.s32.totalorder %s85, %s101
      %p103 = scmp.eq.s32.totalorder %s16, 0
      %p104 = por %p102, %p103
      %s105 = ssub.s32 %s17, %s29
      %s106 = ssub.s32 %s18, %s25
      %s107 = sor.u32 %s105, %s106
      %p108 = scmp.eq.s32.totalorder %s107, 0
      %s110 = sadd.s32 %s109, 1
      %s111 = scalar_select %p108, %s109, %s110
      %p114 = pneg %p108
      %p115 = scmp.eq.s32.totalorder %s10, 1
      %p116 = por %p114, %p115
      %p117 = scmp.ne.s32.totalorder %s109, %s112
      %p118 = scmp.eq.s32.totalorder %s10, 0
      %p119 = por %p117, %p118
      %p120 = scmp.ne.s32.totalorder %s109, %s112
      %p121 = scmp.eq.s32.totalorder %s15, 1
      %p122 = por %p120, %p121
      %p123 = scmp.ne.s32.totalorder %s112, %s113
      %p124 = scmp.eq.s32.totalorder %s15, 0
      %p125 = por %p123, %p124
      %p126 = scmp.ne.s32.totalorder %s112, %s113
      %p127 = scmp.eq.s32.totalorder %s16, 1
      %p128 = por %p126, %p127
      %p130 = scmp.ne.s32.totalorder %s113, %s129
      %p131 = scmp.eq.s32.totalorder %s16, 0
      %p132 = por %p130, %p131
      %p133 = scmp.le.s32.totalorder 1, %s10
      %p134 = scmp.lt.s32.totalorder %s10, 3
      %p135 = pnand %p133, %p134
      %p136 = pneg %p135
      // Predicated region
      $region9: #{tpu_custom_call.1} parent=5 // pred_check
        _
      $region10: #{tpu_custom_call.1} parent=5 // pred_check_branch
        %138 = sbr.rel (%p135) target = $region12
      $region11: #{tpu_custom_call.1} parent=5 // pred_region
        %s139 = ssub.s32 %s10, 1
        // Predicated region
        $region13: #{tpu_custom_call.1} parent=11 // pred_check
          %p140 = pneg %p43
        $region14: #{tpu_custom_call.1} parent=11 // pred_check_branch
          %142 = sbr.rel (%p140) target = $region16
        $region15: #{tpu_custom_call.1} parent=11 // pred_region
          %s144 = ssub.s32 128, 128
          %145 = vsyncadd [#allocation3], %s144
          %s147 = sshll.u32 %s0, 4
          %s148 = int_to_ptr.vmem [resolvable:$true] %s147
          %150 = dma.vmem_to_smem %s148, 128, [#allocation2], [#allocation3]
        $region16: #{tpu_custom_call.1} parent=11 // pred_fallthru
          _
      $region12: #{tpu_custom_call.1} parent=5 // pred_fallthru
        _
      %p151 = scmp.lt.s32.totalorder %s10, 2
      // Predicated region
      $region17: #{tpu_custom_call.1} parent=5 // pred_check
        %p152 = pneg %p151
      $region18: #{tpu_custom_call.1} parent=5 // pred_check_branch
        %154 = sbr.rel (%p152) target = $region20
      $region19: #{tpu_custom_call.1} parent=5 // pred_region
        // Predicated region
        $region21: #{tpu_custom_call.1} parent=19 // pred_check
          %p155 = pneg %p63
        $region22: #{tpu_custom_call.1} parent=19 // pred_check_branch
          %157 = sbr.rel (%p155) target = $region24
        $region23: #{tpu_custom_call.1} parent=19 // pred_region
          %p158 = scmp.lt.s32.totalorder %s17, 1
          %s159 = scalar_select %p158, %s17, 1
          %s160 = smul.addr %s159, 6
          %s161 = smul.addr %s160, 8
          %s162 = scalar_lea.vmem %s1, %s161
        $region24: #{tpu_custom_call.1} parent=19 // pred_fallthru
          _
        // Predicated region
        $region25: #{tpu_custom_call.1} parent=19 // pred_check
          %p163 = pneg %p91
        $region26: #{tpu_custom_call.1} parent=19 // pred_check_branch
          %165 = sbr.rel (%p163) target = $region28
        $region27: #{tpu_custom_call.1} parent=19 // pred_region
          %s166 = smul.u32 8, %s18
          %p167 = scmp.lt.s32.totalorder %s17, 1
          %s168 = scalar_select %p167, %s17, 1
          %p169 = scmp.lt.s32.totalorder %s166, 7
          %s170 = scalar_select %p169, %s166, 7
          %s171 = smul.addr %s170, 3
          %s172 = smul.addr %s168, 24
          %s173 = sadd.s32 %s171, %s172
          %s174 = smul.addr %s173, 8
          %s175 = scalar_lea.vmem %s2, %s174
          %s176 = smul.u32 8, %s18
        $region28: #{tpu_custom_call.1} parent=19 // pred_fallthru
          _
      $region20: #{tpu_custom_call.1} parent=5 // pred_fallthru
        _
      %p177 = scmp.le.s32.totalorder 1, %s10
      %p178 = scmp.lt.s32.totalorder %s10, 3
      %p179 = pnand %p177, %p178
      %p180 = pneg %p179
      // Predicated region
      $region29: #{tpu_custom_call.1} parent=5 // pred_check
        _
      $region30: #{tpu_custom_call.1} parent=5 // pred_check_branch
        %182 = sbr.rel (%p179) target = $region32
      $region31: #{tpu_custom_call.1} parent=5 // pred_region
        %s183 = ssub.s32 %s10, 1
        // Predicated region
        $region33: #{tpu_custom_call.1} parent=31 // pred_check
          %p184 = pneg %p43
        $region34: #{tpu_custom_call.1} parent=31 // pred_check_branch
          %186 = sbr.rel (%p184) target = $region36
        $region35: #{tpu_custom_call.1} parent=31 // pred_region
          %187 = dma.done [#allocation3], 128
        $region36: #{tpu_custom_call.1} parent=31 // pred_fallthru
          _
        %188 = sfence
        %p189 = pneg %p43
        %p190 = pneg %p40
        %p191 = scmp.lt.s32.totalorder %s19, 1
        %s192 = scalar_select %p191, %s19, 1
        %s193 = smul.addr %s192, 6
        %s194 = smul.addr %s193, 8
        %s195 = scalar_lea.vmem %s1, %s194
        %p196 = pneg %p69
        %p197 = pneg %p66
        %s198 = smul.u32 8, %s20
        %p199 = scmp.lt.s32.totalorder %s19, 1
        %s200 = scalar_select %p199, %s19, 1
        %p201 = scmp.lt.s32.totalorder %s198, 7
        %s202 = scalar_select %p201, %s198, 7
        %s203 = smul.addr %s202, 3
        %s204 = smul.addr %s200, 24
        %s205 = sadd.s32 %s203, %s204
        %s206 = smul.addr %s205, 8
        %s207 = scalar_lea.vmem %s2, %s206
        %p208 = pneg %p97
        %p209 = pneg %p94
        %p210 = pneg %p125
        %p211 = pneg %p122
        %s212 = smul.u32 8, %s20
        %p213 = scmp.lt.s32.totalorder %s19, 1
        %s214 = scalar_select %p213, %s19, 1
        %p215 = scmp.lt.s32.totalorder %s212, 7
        %s216 = scalar_select %p215, %s212, 7
        %s217 = smul.addr %s216, 3
        %s218 = smul.addr %s214, 24
        %s219 = sadd.s32 %s217, %s218
        %s220 = smul.addr %s219, 8
        %s221 = scalar_lea.vmem %s3, %s220
        %p222 = scmp.lt.s32.totalorder %s19, 1
        %s223 = scalar_select %p222, %s19, 1
        %s224 = smul.addr %s223, 6
        %s225 = smul.addr %s224, 8
        %s226 = scalar_lea.vmem %s1, %s225
        %s227 = smul.u32 8, %s20
        %p228 = scmp.lt.s32.totalorder %s19, 1
        %s229 = scalar_select %p228, %s19, 1
        %p230 = scmp.lt.s32.totalorder %s227, 7
        %s231 = scalar_select %p230, %s227, 7
        %s232 = smul.addr %s231, 3
        %s233 = smul.addr %s229, 24
        %s234 = sadd.s32 %s232, %s233
        %s235 = smul.addr %s234, 8
        %s236 = scalar_lea.vmem %s2, %s235
        %s237 = smul.u32 8, %s20
        %s238 = smul.u32 8, %s20
        %p239 = scmp.lt.s32.totalorder %s19, 1
        %s240 = scalar_select %p239, %s19, 1
        %p241 = scmp.lt.s32.totalorder %s238, 7
        %s242 = scalar_select %p241, %s238, 7
        %s243 = smul.addr %s242, 3
        %s244 = smul.addr %s240, 24
        %s245 = sadd.s32 %s243, %s244
        %s246 = smul.addr %s245, 8
        %s247 = scalar_lea.vmem %s3, %s246
        %s248 = smul.u32 8, %s20
        %s249 = smul.u32 %s20, 8
        %v250 = vld [vmem:[%s226] sm:$0xff]
        %v251 = vld [vmem:[%s226 + $0x8] sm:$0xff]
        %v252 = vld [vmem:[%s226 + $0x10] sm:$0xff]
        %v253 = vld [vmem:[%s226 + $0x18] sm:$0xff]
        %v254 = vld [vmem:[%s226 + $0x20] sm:$0xff]
        %v255 = vld [vmem:[%s226 + $0x28] sm:$0xff]
        %s256 = smul.u32 %s249, 128
        %s257 = sld [smem:[#allocation2 + %s256]]
        %v258 = vstv %s257
        %v259 = vmul.f32 %v258, %v250
        %v260 = vmul.f32 %v258, %v251
        %s261 = sadd.s32 %s256, 1
        %s262 = sld [smem:[#allocation2 + %s261]]
        %v263 = vstv %s262
        %v264 = vmul.f32 %v263, %v252
        %v265 = vmul.f32 %v263, %v253
        %v266 = vadd.f32 %v259, %v264
        %v267 = vadd.f32 %v260, %v265
        %s268 = sadd.s32 %s256, 2
        %s269 = sld [smem:[#allocation2 + %s268]]
        %v270 = vstv %s269
        %v271 = vmul.f32 %v270, %v254
        %v272 = vmul.f32 %v270, %v255
        %v273 = vadd.f32 %v266, %v271
        %v274 = vadd.f32 %v267, %v272
        %277 = vrot.lane.b32.xlu0 %v273, 1
        %v278 = vpop.permute.xlu0 %277
        %279 = vrot.lane.b32.xlu0 %v274, 1
        %v280 = vpop.permute.xlu0 %279
        %vm283 = vcmask 7168
        %v284 = vsel %vm283, 0.0, %v278
        %v285 = vsel %vm283, 0.0, %v280
        %vm286 = vcmask 138240
        %v287 = vsel %vm286, %v284, 0.0
        %v288 = vsel %vm286, %v285, 0.0
        %vm291 = vcmask 1040384
        %v292 = vrot.slane %v287, 7
        %v293 = vrot.slane %v288, 7
        %v294 = vsel %vm291, %v292, %v293
        %v298 = vsel %vm291, 0.0, %v292
        %v299 = vsel %vm291, %v293, 0.0
        %v300 = vld [vmem:[%s236] sm:$0xff]
        %v301 = vld [vmem:[%s236 + $0x8] sm:$0xff]
        %v302 = vld [vmem:[%s236 + $0x10] sm:$0x3]
        %v303 = vsub.f32 %v298, %v300
        %v304 = vsub.f32 %v294, %v301
        %v305 = vsub.f32 %v299, %v302
        %vm306 = vcmask 146432
        %307 = vst.msk [vmem:[%s247] sm:$0xff] %vm306, %v303
        %308 = vst.msk [vmem:[%s247 + $0x8] sm:$0xff] %vm306, %v304
        %vm309 = vcmask 140288
        %310 = vst.msk [vmem:[%s247 + $0x10] sm:$0x3] %vm309, %v305
        %s311 = sadd.s32 %s249, 1
        %s312 = smul.u32 %s311, 128
        %s313 = sld [smem:[#allocation2 + %s312]]
        %v314 = vstv %s313
        %v315 = vmul.f32 %v314, %v250
        %v316 = vmul.f32 %v314, %v251
        %s317 = sadd.s32 %s312, 1
        %s318 = sld [smem:[#allocation2 + %s317]]
        %v319 = vstv %s318
        %v320 = vmul.f32 %v319, %v252
        %v321 = vmul.f32 %v319, %v253
        %v322 = vadd.f32 %v315, %v320
        %v323 = vadd.f32 %v316, %v321
        %s324 = sadd.s32 %s312, 2
        %s325 = sld [smem:[#allocation2 + %s324]]
        %v326 = vstv %s325
        %v327 = vmul.f32 %v326, %v254
        %v328 = vmul.f32 %v326, %v255
        %v329 = vadd.f32 %v322, %v327
        %v330 = vadd.f32 %v323, %v328
        %333 = vrot.lane.b32.xlu0 %v329, 1
        %v334 = vpop.permute.xlu0 %333
        %335 = vrot.lane.b32.xlu0 %v330, 1
        %v336 = vpop.permute.xlu0 %335
        %v339 = vsel %vm283, 0.0, %v334
        %v340 = vsel %vm283, 0.0, %v336
        %v341 = vsel %vm286, %v339, 0.0
        %v342 = vsel %vm286, %v340, 0.0
        %v345 = vrot.slane %v341, 7
        %v346 = vrot.slane %v342, 7
        %v347 = vsel %vm291, %v345, %v346
        %v351 = vsel %vm291, 0.0, %v345
        %v352 = vsel %vm291, %v346, 0.0
        %s353 = scalar_lea.vmem %s236, 24
        %v354 = vld [vmem:[%s353] sm:$0xff]
        %v355 = vld [vmem:[%s353 + $0x8] sm:$0xff]
        %v356 = vld [vmem:[%s353 + $0x10] sm:$0x3]
        %v357 = vsub.f32 %v351, %v354
        %v358 = vsub.f32 %v347, %v355
        %v359 = vsub.f32 %v352, %v356
        %s360 = scalar_lea.vmem %s247, 24
        %361 = vst.msk [vmem:[%s360] sm:$0xff] %vm306, %v357
        %362 = vst.msk [vmem:[%s360 + $0x8] sm:$0xff] %vm306, %v358
        %363 = vst.msk [vmem:[%s360 + $0x10] sm:$0x3] %vm309, %v359
        %s364 = sadd.s32 %s249, 2
        %s365 = smul.u32 %s364, 128
        %s366 = sld [smem:[#allocation2 + %s365]]
        %v367 = vstv %s366
        %v368 = vmul.f32 %v367, %v250
        %v369 = vmul.f32 %v367, %v251
        %s370 = sadd.s32 %s365, 1
        %s371 = sld [smem:[#allocation2 + %s370]]
        %v372 = vstv %s371
        %v373 = vmul.f32 %v372, %v252
        %v374 = vmul.f32 %v372, %v253
        %v375 = vadd.f32 %v368, %v373
        %v376 = vadd.f32 %v369, %v374
        %s377 = sadd.s32 %s365, 2
        %s378 = sld [smem:[#allocation2 + %s377]]
        %v379 = vstv %s378
        %v380 = vmul.f32 %v379, %v254
        %v381 = vmul.f32 %v379, %v255
        %v382 = vadd.f32 %v375, %v380
        %v383 = vadd.f32 %v376, %v381
        %386 = vrot.lane.b32.xlu0 %v382, 1
        %v387 = vpop.permute.xlu0 %386
        %388 = vrot.lane.b32.xlu0 %v383, 1
        %v389 = vpop.permute.xlu0 %388
        %v392 = vsel %vm283, 0.0, %v387
        %v393 = vsel %vm283, 0.0, %v389
        %v394 = vsel %vm286, %v392, 0.0
        %v395 = vsel %vm286, %v393, 0.0
        %v398 = vrot.slane %v394, 7
        %v399 = vrot.slane %v395, 7
        %v400 = vsel %vm291, %v398, %v399
        %v404 = vsel %vm291, 0.0, %v398
        %v405 = vsel %vm291, %v399, 0.0
        %s406 = scalar_lea.vmem %s236, 48
        %v407 = vld [vmem:[%s406] sm:$0xff]
        %v408 = vld [vmem:[%s406 + $0x8] sm:$0xff]
        %v409 = vld [vmem:[%s406 + $0x10] sm:$0x3]
        %v410 = vsub.f32 %v404, %v407
        %v411 = vsub.f32 %v400, %v408
        %v412 = vsub.f32 %v405, %v409
        %s413 = scalar_lea.vmem %s247, 48
        %414 = vst.msk [vmem:[%s413] sm:$0xff] %vm306, %v410
        %415 = vst.msk [vmem:[%s413 + $0x8] sm:$0xff] %vm306, %v411
        %416 = vst.msk [vmem:[%s413 + $0x10] sm:$0x3] %vm309, %v412
        %s417 = sadd.s32 %s249, 3
        %s418 = smul.u32 %s417, 128
        %s419 = sld [smem:[#allocation2 + %s418]]
        %v420 = vstv %s419
        %v421 = vmul.f32 %v420, %v250
        %v422 = vmul.f32 %v420, %v251
        %s423 = sadd.s32 %s418, 1
        %s424 = sld [smem:[#allocation2 + %s423]]
        %v425 = vstv %s424
        %v426 = vmul.f32 %v425, %v252
        %v427 = vmul.f32 %v425, %v253
        %v428 = vadd.f32 %v421, %v426
        %v429 = vadd.f32 %v422, %v427
        %s430 = sadd.s32 %s418, 2
        %s431 = sld [smem:[#allocation2 + %s430]]
        %v432 = vstv %s431
        %v433 = vmul.f32 %v432, %v254
        %v434 = vmul.f32 %v432, %v255
        %v435 = vadd.f32 %v428, %v433
        %v436 = vadd.f32 %v429, %v434
        %439 = vrot.lane.b32.xlu0 %v435, 1
        %v440 = vpop.permute.xlu0 %439
        %441 = vrot.lane.b32.xlu0 %v436, 1
        %v442 = vpop.permute.xlu0 %441
        %v445 = vsel %vm283, 0.0, %v440
        %v446 = vsel %vm283, 0.0, %v442
        %v447 = vsel %vm286, %v445, 0.0
        %v448 = vsel %vm286, %v446, 0.0
        %v451 = vrot.slane %v447, 7
        %v452 = vrot.slane %v448, 7
        %v453 = vsel %vm291, %v451, %v452
        %v457 = vsel %vm291, 0.0, %v451
        %v458 = vsel %vm291, %v452, 0.0
        %s459 = scalar_lea.vmem %s236, 72
        %v460 = vld [vmem:[%s459] sm:$0xff]
        %v461 = vld [vmem:[%s459 + $0x8] sm:$0xff]
        %v462 = vld [vmem:[%s459 + $0x10] sm:$0x3]
        %v463 = vsub.f32 %v457, %v460
        %v464 = vsub.f32 %v453, %v461
        %v465 = vsub.f32 %v458, %v462
        %s466 = scalar_lea.vmem %s247, 72
        %467 = vst.msk [vmem:[%s466] sm:$0xff] %vm306, %v463
        %468 = vst.msk [vmem:[%s466 + $0x8] sm:$0xff] %vm306, %v464
        %469 = vst.msk [vmem:[%s466 + $0x10] sm:$0x3] %vm309, %v465
        %s470 = sadd.s32 %s249, 4
        %s471 = smul.u32 %s470, 128
        %s472 = sld [smem:[#allocation2 + %s471]]
        %v473 = vstv %s472
        %v474 = vmul.f32 %v473, %v250
        %v475 = vmul.f32 %v473, %v251
        %s476 = sadd.s32 %s471, 1
        %s477 = sld [smem:[#allocation2 + %s476]]
        %v478 = vstv %s477
        %v479 = vmul.f32 %v478, %v252
        %v480 = vmul.f32 %v478, %v253
        %v481 = vadd.f32 %v474, %v479
        %v482 = vadd.f32 %v475, %v480
        %s483 = sadd.s32 %s471, 2
        %s484 = sld [smem:[#allocation2 + %s483]]
        %v485 = vstv %s484
        %v486 = vmul.f32 %v485, %v254
        %v487 = vmul.f32 %v485, %v255
        %v488 = vadd.f32 %v481, %v486
        %v489 = vadd.f32 %v482, %v487
        %492 = vrot.lane.b32.xlu0 %v488, 1
        %v493 = vpop.permute.xlu0 %492
        %494 = vrot.lane.b32.xlu0 %v489, 1
        %v495 = vpop.permute.xlu0 %494
        %v498 = vsel %vm283, 0.0, %v493
        %v499 = vsel %vm283, 0.0, %v495
        %v500 = vsel %vm286, %v498, 0.0
        %v501 = vsel %vm286, %v499, 0.0
        %v504 = vrot.slane %v500, 7
        %v505 = vrot.slane %v501, 7
        %v506 = vsel %vm291, %v504, %v505
        %v510 = vsel %vm291, 0.0, %v504
        %v511 = vsel %vm291, %v505, 0.0
        %s512 = scalar_lea.vmem %s236, 96
        %v513 = vld [vmem:[%s512] sm:$0xff]
        %v514 = vld [vmem:[%s512 + $0x8] sm:$0xff]
        %v515 = vld [vmem:[%s512 + $0x10] sm:$0x3]
        %v516 = vsub.f32 %v510, %v513
        %v517 = vsub.f32 %v506, %v514
        %v518 = vsub.f32 %v511, %v515
        %s519 = scalar_lea.vmem %s247, 96
        %520 = vst.msk [vmem:[%s519] sm:$0xff] %vm306, %v516
        %521 = vst.msk [vmem:[%s519 + $0x8] sm:$0xff] %vm306, %v517
        %522 = vst.msk [vmem:[%s519 + $0x10] sm:$0x3] %vm309, %v518
        %s523 = sadd.s32 %s249, 5
        %s524 = smul.u32 %s523, 128
        %s525 = sld [smem:[#allocation2 + %s524]]
        %v526 = vstv %s525
        %v527 = vmul.f32 %v526, %v250
        %v528 = vmul.f32 %v526, %v251
        %s529 = sadd.s32 %s524, 1
        %s530 = sld [smem:[#allocation2 + %s529]]
        %v531 = vstv %s530
        %v532 = vmul.f32 %v531, %v252
        %v533 = vmul.f32 %v531, %v253
        %v534 = vadd.f32 %v527, %v532
        %v535 = vadd.f32 %v528, %v533
        %s536 = sadd.s32 %s524, 2
        %s537 = sld [smem:[#allocation2 + %s536]]
        %v538 = vstv %s537
        %v539 = vmul.f32 %v538, %v254
        %v540 = vmul.f32 %v538, %v255
        %v541 = vadd.f32 %v534, %v539
        %v542 = vadd.f32 %v535, %v540
        %545 = vrot.lane.b32.xlu0 %v541, 1
        %v546 = vpop.permute.xlu0 %545
        %547 = vrot.lane.b32.xlu0 %v542, 1
        %v548 = vpop.permute.xlu0 %547
        %v551 = vsel %vm283, 0.0, %v546
        %v552 = vsel %vm283, 0.0, %v548
        %v553 = vsel %vm286, %v551, 0.0
        %v554 = vsel %vm286, %v552, 0.0
        %v557 = vrot.slane %v553, 7
        %v558 = vrot.slane %v554, 7
        %v559 = vsel %vm291, %v557, %v558
        %v563 = vsel %vm291, 0.0, %v557
        %v564 = vsel %vm291, %v558, 0.0
        %s565 = scalar_lea.vmem %s236, 120
        %v566 = vld [vmem:[%s565] sm:$0xff]
        %v567 = vld [vmem:[%s565 + $0x8] sm:$0xff]
        %v568 = vld [vmem:[%s565 + $0x10] sm:$0x3]
        %v569 = vsub.f32 %v563, %v566
        %v570 = vsub.f32 %v559, %v567
        %v571 = vsub.f32 %v564, %v568
        %s572 = scalar_lea.vmem %s247, 120
        %573 = vst.msk [vmem:[%s572] sm:$0xff] %vm306, %v569
        %574 = vst.msk [vmem:[%s572 + $0x8] sm:$0xff] %vm306, %v570
        %575 = vst.msk [vmem:[%s572 + $0x10] sm:$0x3] %vm309, %v571
        %s576 = sadd.s32 %s249, 6
        %s577 = smul.u32 %s576, 128
        %s578 = sld [smem:[#allocation2 + %s577]]
        %v579 = vstv %s578
        %v580 = vmul.f32 %v579, %v250
        %v581 = vmul.f32 %v579, %v251
        %s582 = sadd.s32 %s577, 1
        %s583 = sld [smem:[#allocation2 + %s582]]
        %v584 = vstv %s583
        %v585 = vmul.f32 %v584, %v252
        %v586 = vmul.f32 %v584, %v253
        %v587 = vadd.f32 %v580, %v585
        %v588 = vadd.f32 %v581, %v586
        %s589 = sadd.s32 %s577, 2
        %s590 = sld [smem:[#allocation2 + %s589]]
        %v591 = vstv %s590
        %v592 = vmul.f32 %v591, %v254
        %v593 = vmul.f32 %v591, %v255
        %v594 = vadd.f32 %v587, %v592
        %v595 = vadd.f32 %v588, %v593
        %598 = vrot.lane.b32.xlu0 %v594, 1
        %v599 = vpop.permute.xlu0 %598
        %600 = vrot.lane.b32.xlu0 %v595, 1
        %v601 = vpop.permute.xlu0 %600
        %v604 = vsel %vm283, 0.0, %v599
        %v605 = vsel %vm283, 0.0, %v601
        %v606 = vsel %vm286, %v604, 0.0
        %v607 = vsel %vm286, %v605, 0.0
        %v610 = vrot.slane %v606, 7
        %v611 = vrot.slane %v607, 7
        %v612 = vsel %vm291, %v610, %v611
        %v616 = vsel %vm291, 0.0, %v610
        %v617 = vsel %vm291, %v611, 0.0
        %s618 = scalar_lea.vmem %s236, 144
        %v619 = vld [vmem:[%s618] sm:$0xff]
        %v620 = vld [vmem:[%s618 + $0x8] sm:$0xff]
        %v621 = vld [vmem:[%s618 + $0x10] sm:$0x3]
        %v622 = vsub.f32 %v616, %v619
        %v623 = vsub.f32 %v612, %v620
        %v624 = vsub.f32 %v617, %v621
        %s625 = scalar_lea.vmem %s247, 144
        %626 = vst.msk [vmem:[%s625] sm:$0xff] %vm306, %v622
        %627 = vst.msk [vmem:[%s625 + $0x8] sm:$0xff] %vm306, %v623
        %628 = vst.msk [vmem:[%s625 + $0x10] sm:$0x3] %vm309, %v624
        %s629 = sadd.s32 %s249, 7
        %s630 = smul.u32 %s629, 128
        %s631 = sld [smem:[#allocation2 + %s630]]
        %v632 = vstv %s631
        %v633 = vmul.f32 %v632, %v250
        %v634 = vmul.f32 %v632, %v251
        %s635 = sadd.s32 %s630, 1
        %s636 = sld [smem:[#allocation2 + %s635]]
        %v637 = vstv %s636
        %v638 = vmul.f32 %v637, %v252
        %v639 = vmul.f32 %v637, %v253
        %v640 = vadd.f32 %v633, %v638
        %v641 = vadd.f32 %v634, %v639
        %s642 = sadd.s32 %s630, 2
        %s643 = sld [smem:[#allocation2 + %s642]]
        %v644 = vstv %s643
        %v645 = vmul.f32 %v644, %v254
        %v646 = vmul.f32 %v644, %v255
        %v647 = vadd.f32 %v640, %v645
        %v648 = vadd.f32 %v641, %v646
        %651 = vrot.lane.b32.xlu0 %v647, 1
        %v652 = vpop.permute.xlu0 %651
        %653 = vrot.lane.b32.xlu0 %v648, 1
        %v654 = vpop.permute.xlu0 %653
        %v657 = vsel %vm283, 0.0, %v652
        %v658 = vsel %vm283, 0.0, %v654
        %v659 = vsel %vm286, %v657, 0.0
        %v660 = vsel %vm286, %v658, 0.0
        %v663 = vrot.slane %v659, 7
        %v664 = vrot.slane %v660, 7
        %v665 = vsel %vm291, %v663, %v664
        %v669 = vsel %vm291, 0.0, %v663
        %v670 = vsel %vm291, %v664, 0.0
        %s671 = scalar_lea.vmem %s236, 168
        %v672 = vld [vmem:[%s671] sm:$0xff]
        %v673 = vld [vmem:[%s671 + $0x8] sm:$0xff]
        %v674 = vld [vmem:[%s671 + $0x10] sm:$0x3]
        %v675 = vsub.f32 %v669, %v672
        %v676 = vsub.f32 %v665, %v673
        %v677 = vsub.f32 %v670, %v674
        %s678 = scalar_lea.vmem %s247, 168
        %679 = vst.msk [vmem:[%s678] sm:$0xff] %vm306, %v675
        %680 = vst.msk [vmem:[%s678 + $0x8] sm:$0xff] %vm306, %v676
        %681 = vst.msk [vmem:[%s678 + $0x10] sm:$0x3] %vm309, %v677
        %s682 = smul.u32 8, %s20
        %p683 = scmp.lt.s32.totalorder %s19, 1
        %s684 = scalar_select %p683, %s19, 1
        %p685 = scmp.lt.s32.totalorder %s682, 7
        %s686 = scalar_select %p685, %s682, 7
        %s687 = smul.addr %s686, 3
        %s688 = smul.addr %s684, 24
        %s689 = sadd.s32 %s687, %s688
        %s690 = smul.addr %s689, 8
        %s691 = scalar_lea.vmem %s3, %s690
        // Predicated region
        $region37: #{tpu_custom_call.1} parent=31 // pred_check
          %p692 = pneg %p122
        $region38: #{tpu_custom_call.1} parent=31 // pred_check_branch
          %694 = sbr.rel (%p692) target = $region40
        $region39: #{tpu_custom_call.1} parent=31 // pred_region
          %s695 = smul.u32 8, %s20
        $region40: #{tpu_custom_call.1} parent=31 // pred_fallthru
          _
      $region32: #{tpu_custom_call.1} parent=5 // pred_fallthru
        _
      %p696 = scmp.le.s32.totalorder 2, %s10
      // Predicated region
      $region41: #{tpu_custom_call.1} parent=5 // pred_check
        %p697 = pneg %p696
      $region42: #{tpu_custom_call.1} parent=5 // pred_check_branch
        %699 = sbr.rel (%p697) target = $region44
      $region43: #{tpu_custom_call.1} parent=5 // pred_region
        %s700 = ssub.s32 %s10, 2
        // Predicated region
        $region45: #{tpu_custom_call.1} parent=43 // pred_check
          %p701 = pneg %p128
        $region46: #{tpu_custom_call.1} parent=43 // pred_check_branch
          %703 = sbr.rel (%p701) target = $region48
        $region47: #{tpu_custom_call.1} parent=43 // pred_region
          %s704 = smul.u32 8, %s22
          %p705 = scmp.lt.s32.totalorder %s21, 1
          %s706 = scalar_select %p705, %s21, 1
          %p707 = scmp.lt.s32.totalorder %s704, 7
          %s708 = scalar_select %p707, %s704, 7
          %s709 = smul.addr %s708, 3
          %s710 = smul.addr %s706, 24
          %s711 = sadd.s32 %s709, %s710
          %s712 = smul.addr %s711, 8
          %s713 = scalar_lea.vmem %s3, %s712
        $region48: #{tpu_custom_call.1} parent=43 // pred_fallthru
          _
      $region44: #{tpu_custom_call.1} parent=5 // pred_fallthru
        _
    $region6: #{tpu_custom_call.1} parent=1 // loop_footer
      %s14 = sadd.s32 1, %s10
    $region7: #{tpu_custom_call.1} parent=1 // loop_footer_branch
      %9 = sbr.rel target = $region3
    $region8: #{tpu_custom_call.1} parent=1 // loop_exit
      _
    %714 = vsyncpa [#allocation3], 1
    %s715 = scalar_lea.sflag [#allocation3], 1
    %716 = vsyncpa %s715, 1

</llo_original>
